<compile_context>
chip_gen: v7x
topology: tpu7x:2x2x1
jax: 0.10.0
libtpu: 0.0.40
codegen_flags: <defaults>
</compile_context>

<pallas_src>
import functools
import itertools

import numpy as np
import jax
import jax.numpy as jnp
from jax.experimental import pallas as pl
from jax.experimental.pallas import tpu as pltpu

try:  # host-side assignment; no Pallas equivalent
    from scipy.optimize import linear_sum_assignment as _scipy_lsa
except Exception:  # pragma: no cover
    _scipy_lsa = None


# ----------------------------------------------------------------------------
# Pallas kernel: G images' cost tiles per grid step (block-diagonal costs).
#   logits_ref     : (G*nq_pad, nc)     G images' query logits (f32)
#   boxes_ref      : (G*nq_pad, 4)      G images' query boxes, pre-scaled by
#                                        w_bbox (xyxy, f32)
#   tgt_t_ref      : (G, 4, T_pad)      G images' target boxes (transposed,
#                                        pre-scaled by w_bbox, f32)
#   neg_onehot_ref : (G, nc, T_pad)     -w_class * one_hot(labels)  (bf16)
#   c_ref          : (G*nq_pad, T_pad)  output cost tiles (f32)
# ----------------------------------------------------------------------------
def _cost_kernel(logits_ref, boxes_ref, tgt_t_ref, neg_onehot_ref, c_ref,
                 *, G, nq_pad, l1_scale, w_giou):
    # Static unroll over the fused sub-batches; G and all slice starts are
    # compile-time constants, so every load/store below is a static, aligned
    # slice (nq_pad is a multiple of 8, T_pad a multiple of 128).
    for g in range(G):
        r0 = g * nq_pad

        # ---- softmax over classes (f32, EUP exact reciprocal) ----
        logits = logits_ref[r0:r0 + nq_pad, :]
        m = jnp.max(logits, axis=-1, keepdims=True)
        e = jnp.exp(logits - m)
        prob = e * pl.reciprocal(jnp.sum(e, axis=-1, keepdims=True))

        # ---- class-cost gather as a bf16 MXU matmul; one-hot is pre-scaled
        #      by -w_class on host, so this directly yields w_class*cost_class.
        cost = jnp.dot(prob.astype(jnp.bfloat16), neg_onehot_ref[g],
                       preferred_element_type=jnp.float32)   # (nq_pad, T_pad)

        # ---- unpack coordinates (boxes already scaled by w_bbox on host) ----
        b = boxes_ref[r0:r0 + nq_pad, :]          # (nq_pad, 4)
        t = tgt_t_ref[g]                          # (4, T_pad)
        bx0, by0, bx1, by1 = b[:, 0:1], b[:, 1:2], b[:, 2:3], b[:, 3:4]
        tx0, ty0, tx1, ty1 = t[0:1, :], t[1:2, :], t[2:3, :], t[3:4, :]

        # ---- per-coordinate min/max computed once, reused by L1 / inter /
        #      enclosing box (VALU is the saturating slot on these tiles) ----
        mn_x0 = jnp.minimum(bx0, tx0); mx_x0 = jnp.maximum(bx0, tx0)
        mn_y0 = jnp.minimum(by0, ty0); mx_y0 = jnp.maximum(by0, ty0)
        mn_x1 = jnp.minimum(bx1, tx1); mx_x1 = jnp.maximum(bx1, tx1)
        mn_y1 = jnp.minimum(by1, ty1); mx_y1 = jnp.maximum(by1, ty1)

        # ---- cost_bbox = L1 cdist (w_bbox already folded into the coords) ---
        l1 = ((mx_x0 - mn_x0) + (mx_y0 - mn_y0)
              + (mx_x1 - mn_x1) + (mx_y1 - mn_y1))
        if l1_scale != 1.0:          # only when w_bbox could not be folded
            l1 = l1 * l1_scale
        cost = cost + l1

        # ---- generalized IoU (scale-invariant, so w_bbox folding is free);
        #      divisions on the EUP; no clamp on the enclosing box (valid
        #      xyxy => enclose >= inter).  giou = inter/union
        #        - (enclose-union)/enclose = inter*r_u + (union-enclose)*r_e
        if w_giou != 0.0:
            inter = (jnp.maximum(mn_x1 - mx_x0, 0.0) *
                     jnp.maximum(mn_y1 - mx_y0, 0.0))
            area1 = (bx1 - bx0) * (by1 - by0)                 # (nq_pad, 1)
            area2 = (tx1 - tx0) * (ty1 - ty0)                 # (1, T_pad)
            union = area1 + area2 - inter
            enclose = (mx_x1 - mn_x0) * (mx_y1 - mn_y0)
            # NOTE: like the PyTorch reference, no guard for union==0 /
            # enclose==0 (degenerate zero-area disjoint boxes).
            giou = (inter * pl.reciprocal(union)
                    + (union - enclose) * pl.reciprocal(enclose))
            if w_giou == 1.0:
                cost = cost - giou
            else:
                cost = cost - w_giou * giou

        c_ref[r0:r0 + nq_pad, :] = cost


def hungarian_cost_matrix(logits, boxes, tgt_t, neg_onehot, *,
                          num_steps, G, nq_pad, l1_scale, w_giou):
    """Block-diagonal cost chunks, G images per grid step.

    logits     : (num_steps*G*nq_pad, nc)   f32
    boxes      : (num_steps*G*nq_pad, 4)    f32 (pre-scaled by w_bbox)
    tgt_t      : (num_steps*G, 4, T_pad)    f32 (pre-scaled by w_bbox)
    neg_onehot : (num_steps*G, nc, T_pad)   bf16 (-w_class one-hot)
    returns    : (num_steps*G*nq_pad, T_pad) f32
    """
    total_rows, nc = logits.shape
    T_pad = tgt_t.shape[-1]

    kernel = functools.partial(_cost_kernel, G=G, nq_pad=nq_pad,
                               l1_scale=float(l1_scale), w_giou=float(w_giou))

    # TODO(synk): on v7x switch dimension_semantics to (pltpu.CORE_PARALLEL,)
    # (or a pl.core_map over create_tensorcore_mesh) to guarantee the 2-TC
    # split; kept the portable "parallel" here so the kernel compiles cleanly
    # on all generations.
    return pl.pallas_call(
        kernel,
        out_shape=jax.ShapeDtypeStruct((total_rows, T_pad), jnp.float32),
        grid=(num_steps,),
        in_specs=[
            pl.BlockSpec((G * nq_pad, nc), lambda i: (i, 0)),      # logits
            pl.BlockSpec((G * nq_pad, 4), lambda i: (i, 0)),       # boxes
            pl.BlockSpec((G, 4, T_pad), lambda i: (i, 0, 0)),      # targets^T
            pl.BlockSpec((G, nc, T_pad), lambda i: (i, 0, 0)),     # -w_c 1-hot
        ],
        out_specs=pl.BlockSpec((G * nq_pad, T_pad), lambda i: (i, 0)),
        compiler_params=pltpu.CompilerParams(
            dimension_semantics=("parallel",)),
    )(logits, boxes, tgt_t, neg_onehot)


# ----------------------------------------------------------------------------
# Host-side padding of inputs to TPU-friendly shapes.
# TODO(synk): at real DETR sizes, build these padded buffers with jitted jnp
#             on device (or reuse preallocated buffers) and only transfer the
#             (nq, size_i) cost slices back for the assignment.
# ----------------------------------------------------------------------------
def _round_up(x, m):
    return -(-x // m) * m


def _padded_cost_matrix(outputs, targets,
                        cost_class=1.0, cost_bbox=1.0, cost_giou=1.0):
    pred_logits = np.asarray(outputs["pred_logits"], np.float32)
    pred_boxes = np.asarray(outputs["pred_boxes"], np.float32)
    bs, nq, nc = pred_logits.shape
    sizes = [int(np.asarray(t["boxes"]).shape[0]) for t in targets]

    T_pad = max(128, _round_up(max(sizes), 128))    # lane-dense output columns
    nq_pad = max(8, _round_up(nq, 8))               # sublane-aligned rows

    # Fuse G images per grid step, keeping >= 2 steps when bs >= 2 so the
    # batch axis can still split across TensorCores.
    num_steps = 2 if bs >= 2 else 1
    G = -(-bs // num_steps)
    bs_pad = num_steps * G

    # Fold w_bbox into the box coordinates (GIoU is scale-invariant). Only
    # fold for positive weights so box validity (x1>=x0) is preserved.
    if cost_bbox > 0:
        box_scale, l1_scale = float(cost_bbox), 1.0
    else:
        box_scale, l1_scale = 1.0, float(cost_bbox)

    # --- pad queries (pad rows / pad batches use the valid dummy box) ---
    logits_pad = np.zeros((bs_pad, nq_pad, nc), np.float32)
    logits_pad[:bs, :nq, :] = pred_logits
    boxes_pad = np.zeros((bs_pad, nq_pad, 4), np.float32)
    boxes_pad[:, :, 2:] = 1.0
    boxes_pad[:bs, :nq, :] = pred_boxes
    boxes_pad *= box_scale

    # --- pad targets per batch (pad cols: dummy box, zero one-hot) ---
    tgt_t_pad = np.zeros((bs_pad, 4, T_pad), np.float32)
    tgt_t_pad[:, 2:, :] = 1.0
    neg_onehot_pad = np.zeros((bs_pad, nc, T_pad), np.float32)
    for i, t in enumerate(targets):
        tb = np.asarray(t["boxes"], np.float32)
        lb = np.asarray(t["labels"])
        s = tb.shape[0]
        tgt_t_pad[i, :, :s] = tb.T
        neg_onehot_pad[i, lb, np.arange(s)] = -float(cost_class)
    tgt_t_pad *= box_scale

    C = hungarian_cost_matrix(
        jnp.asarray(logits_pad.reshape(bs_pad * nq_pad, nc)),
        jnp.asarray(boxes_pad.reshape(bs_pad * nq_pad, 4)),
        jnp.asarray(tgt_t_pad),
        jnp.asarray(neg_onehot_pad, dtype=jnp.bfloat16),   # exact 0/-w_class
        num_steps=num_steps, G=G, nq_pad=nq_pad,
        l1_scale=l1_scale, w_giou=float(cost_giou))
    C = np.asarray(jax.block_until_ready(C)).reshape(bs_pad, nq_pad, T_pad)
    return C[:bs], nq, sizes


# ----------------------------------------------------------------------------
# Host-side exact linear sum assignment. Hungarian algorithm is a sequential
# combinatorial algorithm with no clean Pallas equivalent; use scipy when
# available, brute force at toy sizes otherwise.
# ----------------------------------------------------------------------------
def _linear_sum_assignment(cost):
    cost = np.asarray(cost, dtype=np.float64)
    if _scipy_lsa is not None:
        r, c = _scipy_lsa(cost)
        return np.asarray(r, np.int64), np.asarray(c, np.int64)
    n_rows, n_cols = cost.shape
    if n_rows < n_cols:
        cols, rows = _linear_sum_assignment(cost.T)
        order = np.argsort(rows)
        return rows[order], cols[order]
    best_perm, best_cost = None, np.inf
    col_idx = np.arange(n_cols)
    for perm in itertools.permutations(range(n_rows), n_cols):
        c = cost[list(perm), col_idx].sum()
        if c < best_cost:
            best_cost, best_perm = c, perm
    rows = np.asarray(best_perm, dtype=np.int64)
    cols = col_idx.astype(np.int64)
    order = np.argsort(rows)
    return rows[order], cols[order]


def hungarian_matcher_forward(outputs, targets,
                              cost_class=1.0, cost_bbox=1.0, cost_giou=1.0):
    C, nq, sizes = _padded_cost_matrix(outputs, targets,
                                       cost_class, cost_bbox, cost_giou)
    indices = []
    for i, s in enumerate(sizes):
        c_i = C[i, :nq, :s]            # drop row/column padding
        indices.append(_linear_sum_assignment(c_i))
    return [(np.asarray(i, dtype=np.int64), np.asarray(j, dtype=np.int64))
            for i, j in indices]


# ----------------------------------------------------------------------------
# Pure-numpy reference for the cost matrix (correctness check only).
# ----------------------------------------------------------------------------
def _ref_cost_matrix(pred_logits, pred_boxes, tgt_ids, tgt_boxes, wc, wb, wg):
    logits = np.asarray(pred_logits, np.float64).reshape(-1, pred_logits.shape[-1])
    p = np.exp(logits - logits.max(-1, keepdims=True))
    p /= p.sum(-1, keepdims=True)
    ob = np.asarray(pred_boxes, np.float64).reshape(-1, 4)
    tb = np.asarray(tgt_boxes, np.float64)
    ids = np.asarray(tgt_ids)
    cc = -p[:, ids]
    cb = np.abs(ob[:, None, :] - tb[None, :, :]).sum(-1)
    a1 = (ob[:, 2] - ob[:, 0]) * (ob[:, 3] - ob[:, 1])
    a2 = (tb[:, 2] - tb[:, 0]) * (tb[:, 3] - tb[:, 1])
    lt = np.maximum(ob[:, None, :2], tb[None, :, :2])
    rb = np.minimum(ob[:, None, 2:], tb[None, :, 2:])
    wh = np.clip(rb - lt, 0, None)
    inter = wh[..., 0] * wh[..., 1]
    union = a1[:, None] + a2[None, :] - inter
    iou = inter / union
    elt = np.minimum(ob[:, None, :2], tb[None, :, :2])
    erb = np.maximum(ob[:, None, 2:], tb[None, :, 2:])
    ewh = np.clip(erb - elt, 0, None)
    earea = ewh[..., 0] * ewh[..., 1]
    giou = iou - (earea - union) / earea
    C = wb * cb + wc * cc + wg * (-giou)
    return C.reshape(pred_logits.shape[0], pred_logits.shape[1], -1)


if __name__ == "__main__":
    key = jax.random.PRNGKey(0)
    bs, nq, nc = 4, 8, 16           # batch=4, num_queries=8, num_classes=16
    sizes = [3, 2, 4, 3]            # targets per image
    T = sum(sizes)

    k1, k2, k3, k4, k5, k6 = jax.random.split(key, 6)
    pred_logits = jax.random.normal(k1, (bs, nq, nc), dtype=jnp.float32)

    # boxes in xyxy with x1>=x0, y1>=y0 (required by generalized_box_iou asserts)
    p_lo = jax.random.uniform(k2, (bs, nq, 2), minval=0.0, maxval=0.5)
    p_wh = jax.random.uniform(k3, (bs, nq, 2), minval=0.05, maxval=0.5)
    pred_boxes = jnp.concatenate([p_lo, p_lo + p_wh], axis=-1)

    t_lo = jax.random.uniform(k4, (T, 2), minval=0.0, maxval=0.5)
    t_wh = jax.random.uniform(k5, (T, 2), minval=0.05, maxval=0.5)
    t_boxes = jnp.concatenate([t_lo, t_lo + t_wh], axis=-1)
    t_labels = jax.random.randint(k6, (T,), 0, nc)

    targets = []
    off = 0
    for s in sizes:
        targets.append({"labels": t_labels[off:off + s],
                        "boxes": t_boxes[off:off + s]})
        off += s
    outputs = {"pred_logits": pred_logits, "pred_boxes": pred_boxes}

    # run the Pallas-backed cost matrix + host assignment
    indices = hungarian_matcher_forward(outputs, targets)

    # verify the block-diagonal kernel costs against a numpy reference.
    # (bf16 MXU operands for the class cost -> relaxed tolerance vs f64)
    C_pad, nq_real, ref_sizes = _padded_cost_matrix(outputs, targets)
    tgt_ids = jnp.concatenate([t["labels"] for t in targets])
    tgt_boxes = jnp.concatenate([t["boxes"] for t in targets])
    C_ref_full = _ref_cost_matrix(pred_logits, pred_boxes, tgt_ids, tgt_boxes,
                                  1.0, 1.0, 1.0)
    col_off = 0
    for i, s in enumerate(ref_sizes):
        np.testing.assert_allclose(
            C_pad[i, :nq_real, :s],
            C_ref_full[i, :, col_off:col_off + s],
            rtol=1e-2, atol=1e-2)
        col_off += s

    # sanity on assignment output structure
    for (i_idx, j_idx), s in zip(indices, sizes):
        assert i_idx.dtype == np.int64 and j_idx.dtype == np.int64
        assert len(i_idx) == s and len(j_idx) == s

    print("KERNEL_OK")
</pallas_src>

<mosaic_0001>
module attributes {stable_mosaic.version = 11 : i64} {
  func.func @_cost_kernel(%arg0: i32, %arg1: memref<16x16xf32, #tpu.memory_space<vmem>>, %arg2: memref<16x4xf32, #tpu.memory_space<vmem>>, %arg3: memref<2x4x128xf32, #tpu.memory_space<vmem>>, %arg4: memref<2x16x128xbf16, #tpu.memory_space<vmem>>, %arg5: memref<16x128xf32, #tpu.memory_space<vmem>>) attributes {dimension_semantics = [#tpu.dimension_semantics<parallel>], iteration_bounds = array<i64: 2>, scalar_prefetch = 0 : i64, scratch_operands = 0 : i64, tpu.core_type = #tpu.core_type<tc>, window_params = [{transform_indices = @transform_0, window_bounds = array<i64: 16, 16>}, {transform_indices = @transform_1, window_bounds = array<i64: 16, 4>}, {transform_indices = @transform_2, window_bounds = array<i64: 2, 4, 128>}, {transform_indices = @transform_3, window_bounds = array<i64: 2, 16, 128>}, {transform_indices = @transform_4, window_bounds = array<i64: 16, 128>}]} {
    %c0 = arith.constant 0 : index
    %c0_0 = arith.constant 0 : index
    %0 = vector.load %arg1[%c0, %c0_0] : memref<16x16xf32, #tpu.memory_space<vmem>>, vector<8x16xf32>
    %cst = arith.constant dense<0xFF800000> : vector<8xf32>
    %1 = vector.multi_reduction <maximumf>, %0, %cst [1] : vector<8x16xf32> to vector<8xf32>
    %2 = vector.shape_cast %1 : vector<8xf32> to vector<8x1xf32>
    %3 = vector.broadcast %2 : vector<8x1xf32> to vector<8x16xf32>
    %4 = arith.subf %0, %3 : vector<8x16xf32>
    %5 = math.exp %4 : vector<8x16xf32>
    %cst_1 = arith.constant dense<0.000000e+00> : vector<8xf32>
    %6 = vector.multi_reduction <add>, %5, %cst_1 [1] : vector<8x16xf32> to vector<8xf32>
    %7 = vector.shape_cast %6 : vector<8xf32> to vector<8x1xf32>
    %8 = tpu.reciprocal %7 : vector<8x1xf32> -> vector<8x1xf32>
    %9 = vector.broadcast %8 : vector<8x1xf32> to vector<8x16xf32>
    %10 = arith.mulf %5, %9 : vector<8x16xf32>
    %11 = arith.truncf %10 : vector<8x16xf32> to vector<8x16xbf16>
    %c0_2 = arith.constant 0 : index
    %c0_3 = arith.constant 0 : index
    %c0_4 = arith.constant 0 : index
    %12 = vector.load %arg4[%c0_2, %c0_3, %c0_4] : memref<2x16x128xbf16, #tpu.memory_space<vmem>>, vector<1x16x128xbf16>
    %13 = vector.shape_cast %12 : vector<1x16x128xbf16> to vector<16x128xbf16>
    %cst_5 = arith.constant dense<0.000000e+00> : vector<8x128xf32>
    %14 = tpu.matmul %11, %13, %cst_5 {dimension_numbers = #tpu.dot_dimension_numbers<[1], [0], [0], [1], [0, 0, 1, 1], [], []>} : vector<8x16xbf16>, vector<16x128xbf16>, vector<8x128xf32> -> vector<8x128xf32>
    %c0_6 = arith.constant 0 : index
    %c0_7 = arith.constant 0 : index
    %15 = vector.load %arg2[%c0_6, %c0_7] : memref<16x4xf32, #tpu.memory_space<vmem>>, vector<8x4xf32>
    %c0_8 = arith.constant 0 : index
    %c0_9 = arith.constant 0 : index
    %c0_10 = arith.constant 0 : index
    %16 = vector.load %arg3[%c0_8, %c0_9, %c0_10] : memref<2x4x128xf32, #tpu.memory_space<vmem>>, vector<1x4x128xf32>
    %17 = vector.shape_cast %16 : vector<1x4x128xf32> to vector<4x128xf32>
    %18 = vector.extract_strided_slice %15 {offsets = [0, 0], sizes = [8, 1], strides = [1, 1]} : vector<8x4xf32> to vector<8x1xf32>
    %19 = vector.extract_strided_slice %15 {offsets = [0, 1], sizes = [8, 1], strides = [1, 1]} : vector<8x4xf32> to vector<8x1xf32>
    %20 = vector.extract_strided_slice %15 {offsets = [0, 2], sizes = [8, 1], strides = [1, 1]} : vector<8x4xf32> to vector<8x1xf32>
    %21 = vector.extract_strided_slice %15 {offsets = [0, 3], sizes = [8, 1], strides = [1, 1]} : vector<8x4xf32> to vector<8x1xf32>
    %22 = vector.extract_strided_slice %17 {offsets = [0, 0], sizes = [1, 128], strides = [1, 1]} : vector<4x128xf32> to vector<1x128xf32>
    %23 = vector.extract_strided_slice %17 {offsets = [1, 0], sizes = [1, 128], strides = [1, 1]} : vector<4x128xf32> to vector<1x128xf32>
    %24 = vector.extract_strided_slice %17 {offsets = [2, 0], sizes = [1, 128], strides = [1, 1]} : vector<4x128xf32> to vector<1x128xf32>
    %25 = vector.extract_strided_slice %17 {offsets = [3, 0], sizes = [1, 128], strides = [1, 1]} : vector<4x128xf32> to vector<1x128xf32>
    %26 = vector.broadcast %18 : vector<8x1xf32> to vector<8x128xf32>
    %27 = vector.broadcast %22 : vector<1x128xf32> to vector<8x128xf32>
    %28 = arith.minimumf %26, %27 : vector<8x128xf32>
    %29 = vector.broadcast %18 : vector<8x1xf32> to vector<8x128xf32>
    %30 = vector.broadcast %22 : vector<1x128xf32> to vector<8x128xf32>
    %31 = arith.maximumf %29, %30 : vector<8x128xf32>
    %32 = vector.broadcast %19 : vector<8x1xf32> to vector<8x128xf32>
    %33 = vector.broadcast %23 : vector<1x128xf32> to vector<8x128xf32>
    %34 = arith.minimumf %32, %33 : vector<8x128xf32>
    %35 = vector.broadcast %19 : vector<8x1xf32> to vector<8x128xf32>
    %36 = vector.broadcast %23 : vector<1x128xf32> to vector<8x128xf32>
    %37 = arith.maximumf %35, %36 : vector<8x128xf32>
    %38 = vector.broadcast %20 : vector<8x1xf32> to vector<8x128xf32>
    %39 = vector.broadcast %24 : vector<1x128xf32> to vector<8x128xf32>
    %40 = arith.minimumf %38, %39 : vector<8x128xf32>
    %41 = vector.broadcast %20 : vector<8x1xf32> to vector<8x128xf32>
    %42 = vector.broadcast %24 : vector<1x128xf32> to vector<8x128xf32>
    %43 = arith.maximumf %41, %42 : vector<8x128xf32>
    %44 = vector.broadcast %21 : vector<8x1xf32> to vector<8x128xf32>
    %45 = vector.broadcast %25 : vector<1x128xf32> to vector<8x128xf32>
    %46 = arith.minimumf %44, %45 : vector<8x128xf32>
    %47 = vector.broadcast %21 : vector<8x1xf32> to vector<8x128xf32>
    %48 = vector.broadcast %25 : vector<1x128xf32> to vector<8x128xf32>
    %49 = arith.maximumf %47, %48 : vector<8x128xf32>
    %50 = arith.subf %31, %28 : vector<8x128xf32>
    %51 = arith.subf %37, %34 : vector<8x128xf32>
    %52 = arith.addf %50, %51 : vector<8x128xf32>
    %53 = arith.subf %43, %40 : vector<8x128xf32>
    %54 = arith.addf %52, %53 : vector<8x128xf32>
    %55 = arith.subf %49, %46 : vector<8x128xf32>
    %56 = arith.addf %54, %55 : vector<8x128xf32>
    %57 = arith.addf %14, %56 : vector<8x128xf32>
    %58 = arith.subf %40, %31 : vector<8x128xf32>
    %cst_11 = arith.constant 0.000000e+00 : f32
    %59 = vector.broadcast %cst_11 : f32 to vector<8x128xf32>
    %60 = arith.maximumf %58, %59 : vector<8x128xf32>
    %61 = arith.subf %46, %37 : vector<8x128xf32>
    %cst_12 = arith.constant 0.000000e+00 : f32
    %62 = vector.broadcast %cst_12 : f32 to vector<8x128xf32>
    %63 = arith.maximumf %61, %62 : vector<8x128xf32>
    %64 = arith.mulf %60, %63 : vector<8x128xf32>
    %65 = arith.subf %20, %18 : vector<8x1xf32>
    %66 = arith.subf %21, %19 : vector<8x1xf32>
    %67 = arith.mulf %65, %66 : vector<8x1xf32>
    %68 = arith.subf %24, %22 : vector<1x128xf32>
    %69 = arith.subf %25, %23 : vector<1x128xf32>
    %70 = arith.mulf %68, %69 : vector<1x128xf32>
    %71 = vector.broadcast %67 : vector<8x1xf32> to vector<8x128xf32>
    %72 = vector.broadcast %70 : vector<1x128xf32> to vector<8x128xf32>
    %73 = arith.addf %71, %72 : vector<8x128xf32>
    %74 = arith.subf %73, %64 : vector<8x128xf32>
    %75 = arith.subf %43, %28 : vector<8x128xf32>
    %76 = arith.subf %49, %34 : vector<8x128xf32>
    %77 = arith.mulf %75, %76 : vector<8x128xf32>
    %78 = tpu.reciprocal %74 : vector<8x128xf32> -> vector<8x128xf32>
    %79 = arith.mulf %64, %78 : vector<8x128xf32>
    %80 = arith.subf %74, %77 : vector<8x128xf32>
    %81 = tpu.reciprocal %77 : vector<8x128xf32> -> vector<8x128xf32>
    %82 = arith.mulf %80, %81 : vector<8x128xf32>
    %83 = arith.addf %79, %82 : vector<8x128xf32>
    %84 = arith.subf %57, %83 : vector<8x128xf32>
    %c0_13 = arith.constant 0 : index
    %c0_14 = arith.constant 0 : index
    %85 = vector.load %arg5[%c0_13, %c0_14] : memref<16x128xf32, #tpu.memory_space<vmem>>, vector<8x128xf32>
    tpu.vector_store %arg5[%c0_13, %c0_14], %84 {strides = array<i32>} : memref<16x128xf32, #tpu.memory_space<vmem>>, vector<8x128xf32>,
    %c8 = arith.constant 8 : index
    %c0_15 = arith.constant 0 : index
    %86 = vector.load %arg1[%c8, %c0_15] : memref<16x16xf32, #tpu.memory_space<vmem>>, vector<8x16xf32>
    %cst_16 = arith.constant dense<0xFF800000> : vector<8xf32>
    %87 = vector.multi_reduction <maximumf>, %86, %cst_16 [1] : vector<8x16xf32> to vector<8xf32>
    %88 = vector.shape_cast %87 : vector<8xf32> to vector<8x1xf32>
    %89 = vector.broadcast %88 : vector<8x1xf32> to vector<8x16xf32>
    %90 = arith.subf %86, %89 : vector<8x16xf32>
    %91 = math.exp %90 : vector<8x16xf32>
    %cst_17 = arith.constant dense<0.000000e+00> : vector<8xf32>
    %92 = vector.multi_reduction <add>, %91, %cst_17 [1] : vector<8x16xf32> to vector<8xf32>
    %93 = vector.shape_cast %92 : vector<8xf32> to vector<8x1xf32>
    %94 = tpu.reciprocal %93 : vector<8x1xf32> -> vector<8x1xf32>
    %95 = vector.broadcast %94 : vector<8x1xf32> to vector<8x16xf32>
    %96 = arith.mulf %91, %95 : vector<8x16xf32>
    %97 = arith.truncf %96 : vector<8x16xf32> to vector<8x16xbf16>
    %c1 = arith.constant 1 : index
    %c0_18 = arith.constant 0 : index
    %c0_19 = arith.constant 0 : index
    %98 = vector.load %arg4[%c1, %c0_18, %c0_19] : memref<2x16x128xbf16, #tpu.memory_space<vmem>>, vector<1x16x128xbf16>
    %99 = vector.shape_cast %98 : vector<1x16x128xbf16> to vector<16x128xbf16>
    %cst_20 = arith.constant dense<0.000000e+00> : vector<8x128xf32>
    %100 = tpu.matmul %97, %99, %cst_20 {dimension_numbers = #tpu.dot_dimension_numbers<[1], [0], [0], [1], [0, 0, 1, 1], [], []>} : vector<8x16xbf16>, vector<16x128xbf16>, vector<8x128xf32> -> vector<8x128xf32>
    %c8_21 = arith.constant 8 : index
    %c0_22 = arith.constant 0 : index
    %101 = vector.load %arg2[%c8_21, %c0_22] : memref<16x4xf32, #tpu.memory_space<vmem>>, vector<8x4xf32>
    %c1_23 = arith.constant 1 : index
    %c0_24 = arith.constant 0 : index
    %c0_25 = arith.constant 0 : index
    %102 = vector.load %arg3[%c1_23, %c0_24, %c0_25] : memref<2x4x128xf32, #tpu.memory_space<vmem>>, vector<1x4x128xf32>
    %103 = vector.shape_cast %102 : vector<1x4x128xf32> to vector<4x128xf32>
    %104 = vector.extract_strided_slice %101 {offsets = [0, 0], sizes = [8, 1], strides = [1, 1]} : vector<8x4xf32> to vector<8x1xf32>
    %105 = vector.extract_strided_slice %101 {offsets = [0, 1], sizes = [8, 1], strides = [1, 1]} : vector<8x4xf32> to vector<8x1xf32>
    %106 = vector.extract_strided_slice %101 {offsets = [0, 2], sizes = [8, 1], strides = [1, 1]} : vector<8x4xf32> to vector<8x1xf32>
    %107 = vector.extract_strided_slice %101 {offsets = [0, 3], sizes = [8, 1], strides = [1, 1]} : vector<8x4xf32> to vector<8x1xf32>
    %108 = vector.extract_strided_slice %103 {offsets = [0, 0], sizes = [1, 128], strides = [1, 1]} : vector<4x128xf32> to vector<1x128xf32>
    %109 = vector.extract_strided_slice %103 {offsets = [1, 0], sizes = [1, 128], strides = [1, 1]} : vector<4x128xf32> to vector<1x128xf32>
    %110 = vector.extract_strided_slice %103 {offsets = [2, 0], sizes = [1, 128], strides = [1, 1]} : vector<4x128xf32> to vector<1x128xf32>
    %111 = vector.extract_strided_slice %103 {offsets = [3, 0], sizes = [1, 128], strides = [1, 1]} : vector<4x128xf32> to vector<1x128xf32>
    %112 = vector.broadcast %104 : vector<8x1xf32> to vector<8x128xf32>
    %113 = vector.broadcast %108 : vector<1x128xf32> to vector<8x128xf32>
    %114 = arith.minimumf %112, %113 : vector<8x128xf32>
    %115 = vector.broadcast %104 : vector<8x1xf32> to vector<8x128xf32>
    %116 = vector.broadcast %108 : vector<1x128xf32> to vector<8x128xf32>
    %117 = arith.maximumf %115, %116 : vector<8x128xf32>
    %118 = vector.broadcast %105 : vector<8x1xf32> to vector<8x128xf32>
    %119 = vector.broadcast %109 : vector<1x128xf32> to vector<8x128xf32>
    %120 = arith.minimumf %118, %119 : vector<8x128xf32>
    %121 = vector.broadcast %105 : vector<8x1xf32> to vector<8x128xf32>
    %122 = vector.broadcast %109 : vector<1x128xf32> to vector<8x128xf32>
    %123 = arith.maximumf %121, %122 : vector<8x128xf32>
    %124 = vector.broadcast %106 : vector<8x1xf32> to vector<8x128xf32>
    %125 = vector.broadcast %110 : vector<1x128xf32> to vector<8x128xf32>
    %126 = arith.minimumf %124, %125 : vector<8x128xf32>
    %127 = vector.broadcast %106 : vector<8x1xf32> to vector<8x128xf32>
    %128 = vector.broadcast %110 : vector<1x128xf32> to vector<8x128xf32>
    %129 = arith.maximumf %127, %128 : vector<8x128xf32>
    %130 = vector.broadcast %107 : vector<8x1xf32> to vector<8x128xf32>
    %131 = vector.broadcast %111 : vector<1x128xf32> to vector<8x128xf32>
    %132 = arith.minimumf %130, %131 : vector<8x128xf32>
    %133 = vector.broadcast %107 : vector<8x1xf32> to vector<8x128xf32>
    %134 = vector.broadcast %111 : vector<1x128xf32> to vector<8x128xf32>
    %135 = arith.maximumf %133, %134 : vector<8x128xf32>
    %136 = arith.subf %117, %114 : vector<8x128xf32>
    %137 = arith.subf %123, %120 : vector<8x128xf32>
    %138 = arith.addf %136, %137 : vector<8x128xf32>
    %139 = arith.subf %129, %126 : vector<8x128xf32>
    %140 = arith.addf %138, %139 : vector<8x128xf32>
    %141 = arith.subf %135, %132 : vector<8x128xf32>
    %142 = arith.addf %140, %141 : vector<8x128xf32>
    %143 = arith.addf %100, %142 : vector<8x128xf32>
    %144 = arith.subf %126, %117 : vector<8x128xf32>
    %cst_26 = arith.constant 0.000000e+00 : f32
    %145 = vector.broadcast %cst_26 : f32 to vector<8x128xf32>
    %146 = arith.maximumf %144, %145 : vector<8x128xf32>
    %147 = arith.subf %132, %123 : vector<8x128xf32>
    %cst_27 = arith.constant 0.000000e+00 : f32
    %148 = vector.broadcast %cst_27 : f32 to vector<8x128xf32>
    %149 = arith.maximumf %147, %148 : vector<8x128xf32>
    %150 = arith.mulf %146, %149 : vector<8x128xf32>
    %151 = arith.subf %106, %104 : vector<8x1xf32>
    %152 = arith.subf %107, %105 : vector<8x1xf32>
    %153 = arith.mulf %151, %152 : vector<8x1xf32>
    %154 = arith.subf %110, %108 : vector<1x128xf32>
    %155 = arith.subf %111, %109 : vector<1x128xf32>
    %156 = arith.mulf %154, %155 : vector<1x128xf32>
    %157 = vector.broadcast %153 : vector<8x1xf32> to vector<8x128xf32>
    %158 = vector.broadcast %156 : vector<1x128xf32> to vector<8x128xf32>
    %159 = arith.addf %157, %158 : vector<8x128xf32>
    %160 = arith.subf %159, %150 : vector<8x128xf32>
    %161 = arith.subf %129, %114 : vector<8x128xf32>
    %162 = arith.subf %135, %120 : vector<8x128xf32>
    %163 = arith.mulf %161, %162 : vector<8x128xf32>
    %164 = tpu.reciprocal %160 : vector<8x128xf32> -> vector<8x128xf32>
    %165 = arith.mulf %150, %164 : vector<8x128xf32>
    %166 = arith.subf %160, %163 : vector<8x128xf32>
    %167 = tpu.reciprocal %163 : vector<8x128xf32> -> vector<8x128xf32>
    %168 = arith.mulf %166, %167 : vector<8x128xf32>
    %169 = arith.addf %165, %168 : vector<8x128xf32>
    %170 = arith.subf %143, %169 : vector<8x128xf32>
    %c8_28 = arith.constant 8 : index
    %c0_29 = arith.constant 0 : index
    %171 = vector.load %arg5[%c8_28, %c0_29] : memref<16x128xf32, #tpu.memory_space<vmem>>, vector<8x128xf32>
    tpu.vector_store %arg5[%c8_28, %c0_29], %170 {strides = array<i32>} : memref<16x128xf32, #tpu.memory_space<vmem>>, vector<8x128xf32>,
    return
  }
  func.func @transform_0(%arg0: i32) -> (i32, i32) {
    %c0_i32 = arith.constant 0 : i32
    %c0_i32_0 = arith.constant 0 : i32
    return %arg0, %c0_i32 : i32, i32
  }
  func.func @transform_1(%arg0: i32) -> (i32, i32) {
    %c0_i32 = arith.constant 0 : i32
    %c0_i32_0 = arith.constant 0 : i32
    return %arg0, %c0_i32 : i32, i32
  }
  func.func @transform_2(%arg0: i32) -> (i32, i32, i32) {
    %c0_i32 = arith.constant 0 : i32
    %c0_i32_0 = arith.constant 0 : i32
    %c0_i32_1 = arith.constant 0 : i32
    return %arg0, %c0_i32, %c0_i32_0 : i32, i32, i32
  }
  func.func @transform_3(%arg0: i32) -> (i32, i32, i32) {
    %c0_i32 = arith.constant 0 : i32
    %c0_i32_0 = arith.constant 0 : i32
    %c0_i32_1 = arith.constant 0 : i32
    return %arg0, %c0_i32, %c0_i32_0 : i32, i32, i32
  }
  func.func @transform_4(%arg0: i32) -> (i32, i32) {
    %c0_i32 = arith.constant 0 : i32
    %c0_i32_0 = arith.constant 0 : i32
    return %arg0, %c0_i32 : i32, i32
  }
}

</mosaic_0001>

<llo_original>
// kernel: tpu_custom_call.1
$region0: #{tpu_custom_call.1}
  #allocation0 [shape = 'u32[]', space=smem, size = 0x4, offset = 0x4, fixed_abs, tag = 'smem constant byte address 0x4 - core index']
  #allocation1 [shape = 'u32[144,128]{1,0:T(1,128)}', space=vmem, size = 0x12000, scoped, tag = 'internal scratch']
  %s0 = inlined_call_operand.vmem [shape: f32[32,16], index: 0, kind: input, shape index: {}]
  %s1 = inlined_call_operand.vmem [shape: f32[32,4], index: 1, kind: input, shape index: {}]
  %s2 = inlined_call_operand.vmem [shape: f32[4,4,128], index: 2, kind: input, shape index: {}]
  %s3 = inlined_call_operand.vmem [shape: bf16[4,16,128], index: 3, kind: input, shape index: {}]
  %s4 = inlined_call_operand.hbm [shape: f32[32,128], index: 4, kind: output, shape index: {}]
  %s5 = sld [smem:[#allocation0]]
  $region49: #{tpu_custom_call.1} parent=0
    _
  %s7 = ssub.s32 1, %s5
  %s8 = scalar_select 0, %s7, %s5
  $region1: #{tpu_custom_call.1} parent=0
    #allocation2 [shape = 'u8[16384]{0}', space=vmem, size = 0x4000, scoped, tag = 'output window, operand 0']
    #allocation3 [shape = 's32[2]{0}', space=sflag, size = 0x8, scoped, tag = 'scoped memory for tpu_custom_call.1']
    %9 = vsyncpa [#allocation3], 0
    %s10 = scalar_lea.sflag [#allocation3], 1
    %11 = vsyncpa %s10, 0
    loop: start=0, step=1, limit=4
    $region2: #{tpu_custom_call.1} parent=1 // loop_pre_header
      _
    $region3: #{tpu_custom_call.1} parent=1 // loop_header
      %s13 = sphi 0, %s17
      %p14 = scmp.ge.s32.totalorder %s13, 4
      %s23 = sphi 0, %s25
      %s26 = sphi 0, %s23
      %s27 = sphi 0, %s26
      %s43 = sphi 0, %s27
      %s49 = sphi 0, %s51
      %s52 = sphi 0, %s49
      %s53 = sphi 0, %s52
      %s69 = sphi 0, %s53
      %s75 = sphi 0, %s77
      %s78 = sphi 0, %s75
      %s79 = sphi 0, %s78
      %s95 = sphi 0, %s79
      %s101 = sphi 0, %s103
      %s104 = sphi 0, %s101
      %s105 = sphi 0, %s104
      %s121 = sphi 0, %s105
      %s127 = sphi 0, %s129
      %s130 = sphi 0, %s127
      %s131 = sphi 0, %s130
      %s147 = sphi 0, %s131
    $region4: #{tpu_custom_call.1} parent=1 // loop_header_branch
      %16 = sbr.rel (%p14) target = $region8
    $region5: #{tpu_custom_call.1} parent=1 // loop_body
      %s18 = ssub.s32 %s13, 1
      %s19 = ssub.s32 %s13, 2
      %s20 = sadd.s32 %s13, 1
      %s21 = ssub.s32 %s13, %s20
      %p22 = scmp.eq.s32.totalorder %s21, 0
      %s24 = sadd.s32 %s23, 1
      %s25 = scalar_select %p22, %s23, %s24
      %p28 = pneg %p22
      %p29 = scmp.eq.s32.totalorder %s13, 1
      %p30 = por %p28, %p29
      %p31 = scmp.ne.s32.totalorder %s23, %s26
      %p32 = scmp.eq.s32.totalorder %s13, 0
      %p33 = por %p31, %p32
      %p34 = scmp.ne.s32.totalorder %s23, %s26
      %p35 = scmp.eq.s32.totalorder %s18, 1
      %p36 = por %p34, %p35
      %p37 = scmp.ne.s32.totalorder %s26, %s27
      %p38 = scmp.eq.s32.totalorder %s18, 0
      %p39 = por %p37, %p38
      %p40 = scmp.ne.s32.totalorder %s26, %s27
      %p41 = scmp.eq.s32.totalorder %s19, 1
      %p42 = por %p40, %p41
      %p44 = scmp.ne.s32.totalorder %s27, %s43
      %p45 = scmp.eq.s32.totalorder %s19, 0
      %p46 = por %p44, %p45
      %s47 = ssub.s32 %s13, %s20
      %p48 = scmp.eq.s32.totalorder %s47, 0
      %s50 = sadd.s32 %s49, 1
      %s51 = scalar_select %p48, %s49, %s50
      %p54 = pneg %p48
      %p55 = scmp.eq.s32.totalorder %s13, 1
      %p56 = por %p54, %p55
      %p57 = scmp.ne.s32.totalorder %s49, %s52
      %p58 = scmp.eq.s32.totalorder %s13, 0
      %p59 = por %p57, %p58
      %p60 = scmp.ne.s32.totalorder %s49, %s52
      %p61 = scmp.eq.s32.totalorder %s18, 1
      %p62 = por %p60, %p61
      %p63 = scmp.ne.s32.totalorder %s52, %s53
      %p64 = scmp.eq.s32.totalorder %s18, 0
      %p65 = por %p63, %p64
      %p66 = scmp.ne.s32.totalorder %s52, %s53
      %p67 = scmp.eq.s32.totalorder %s19, 1
      %p68 = por %p66, %p67
      %p70 = scmp.ne.s32.totalorder %s53, %s69
      %p71 = scmp.eq.s32.totalorder %s19, 0
      %p72 = por %p70, %p71
      %s73 = ssub.s32 %s13, %s20
      %p74 = scmp.eq.s32.totalorder %s73, 0
      %s76 = sadd.s32 %s75, 1
      %s77 = scalar_select %p74, %s75, %s76
      %p80 = pneg %p74
      %p81 = scmp.eq.s32.totalorder %s13, 1
      %p82 = por %p80, %p81
      %p83 = scmp.ne.s32.totalorder %s75, %s78
      %p84 = scmp.eq.s32.totalorder %s13, 0
      %p85 = por %p83, %p84
      %p86 = scmp.ne.s32.totalorder %s75, %s78
      %p87 = scmp.eq.s32.totalorder %s18, 1
      %p88 = por %p86, %p87
      %p89 = scmp.ne.s32.totalorder %s78, %s79
      %p90 = scmp.eq.s32.totalorder %s18, 0
      %p91 = por %p89, %p90
      %p92 = scmp.ne.s32.totalorder %s78, %s79
      %p93 = scmp.eq.s32.totalorder %s19, 1
      %p94 = por %p92, %p93
      %p96 = scmp.ne.s32.totalorder %s79, %s95
      %p97 = scmp.eq.s32.totalorder %s19, 0
      %p98 = por %p96, %p97
      %s99 = ssub.s32 %s13, %s20
      %p100 = scmp.eq.s32.totalorder %s99, 0
      %s102 = sadd.s32 %s101, 1
      %s103 = scalar_select %p100, %s101, %s102
      %p106 = pneg %p100
      %p107 = scmp.eq.s32.totalorder %s13, 1
      %p108 = por %p106, %p107
      %p109 = scmp.ne.s32.totalorder %s101, %s104
      %p110 = scmp.eq.s32.totalorder %s13, 0
      %p111 = por %p109, %p110
      %p112 = scmp.ne.s32.totalorder %s101, %s104
      %p113 = scmp.eq.s32.totalorder %s18, 1
      %p114 = por %p112, %p113
      %p115 = scmp.ne.s32.totalorder %s104, %s105
      %p116 = scmp.eq.s32.totalorder %s18, 0
      %p117 = por %p115, %p116
      %p118 = scmp.ne.s32.totalorder %s104, %s105
      %p119 = scmp.eq.s32.totalorder %s19, 1
      %p120 = por %p118, %p119
      %p122 = scmp.ne.s32.totalorder %s105, %s121
      %p123 = scmp.eq.s32.totalorder %s19, 0
      %p124 = por %p122, %p123
      %s125 = ssub.s32 %s13, %s20
      %p126 = scmp.eq.s32.totalorder %s125, 0
      %s128 = sadd.s32 %s127, 1
      %s129 = scalar_select %p126, %s127, %s128
      %p132 = pneg %p126
      %p133 = scmp.eq.s32.totalorder %s13, 1
      %p134 = por %p132, %p133
      %p135 = scmp.ne.s32.totalorder %s127, %s130
      %p136 = scmp.eq.s32.totalorder %s13, 0
      %p137 = por %p135, %p136
      %p138 = scmp.ne.s32.totalorder %s127, %s130
      %p139 = scmp.eq.s32.totalorder %s18, 1
      %p140 = por %p138, %p139
      %p141 = scmp.ne.s32.totalorder %s130, %s131
      %p142 = scmp.eq.s32.totalorder %s18, 0
      %p143 = por %p141, %p142
      %p144 = scmp.ne.s32.totalorder %s130, %s131
      %p145 = scmp.eq.s32.totalorder %s19, 1
      %p146 = por %p144, %p145
      %p148 = scmp.ne.s32.totalorder %s131, %s147
      %p149 = scmp.eq.s32.totalorder %s19, 0
      %p150 = por %p148, %p149
      %p151 = scmp.le.s32.totalorder 1, %s13
      %p152 = scmp.lt.s32.totalorder %s13, 3
      %p153 = pnand %p151, %p152
      %p154 = pneg %p153
      // Predicated region
      $region9: #{tpu_custom_call.1} parent=5 // pred_check
        _
      $region10: #{tpu_custom_call.1} parent=5 // pred_check_branch
        %156 = sbr.rel (%p153) target = $region12
      $region11: #{tpu_custom_call.1} parent=5 // pred_region
        %s157 = ssub.s32 %s13, 1
      $region12: #{tpu_custom_call.1} parent=5 // pred_fallthru
        _
      %p158 = scmp.lt.s32.totalorder %s13, 2
      // Predicated region
      $region13: #{tpu_custom_call.1} parent=5 // pred_check
        %p159 = pneg %p158
      $region14: #{tpu_custom_call.1} parent=5 // pred_check_branch
        %161 = sbr.rel (%p159) target = $region16
      $region15: #{tpu_custom_call.1} parent=5 // pred_region
        // Predicated region
        $region17: #{tpu_custom_call.1} parent=15 // pred_check
          %p162 = pneg %p33
        $region18: #{tpu_custom_call.1} parent=15 // pred_check_branch
          %164 = sbr.rel (%p162) target = $region20
        $region19: #{tpu_custom_call.1} parent=15 // pred_region
          %s165 = smul.u32 2, %s13
          %p166 = scmp.lt.s32.totalorder %s165, 3
          %s167 = scalar_select %p166, %s165, 3
          %s168 = smul.addr %s167, 8
          %s169 = scalar_lea.vmem %s0, %s168
          %s170 = smul.u32 2, %s13
        $region20: #{tpu_custom_call.1} parent=15 // pred_fallthru
          _
        // Predicated region
        $region21: #{tpu_custom_call.1} parent=15 // pred_check
          %p171 = pneg %p59
        $region22: #{tpu_custom_call.1} parent=15 // pred_check_branch
          %173 = sbr.rel (%p171) target = $region24
        $region23: #{tpu_custom_call.1} parent=15 // pred_region
          %s174 = smul.u32 2, %s13
          %p175 = scmp.lt.s32.totalorder %s174, 3
          %s176 = scalar_select %p175, %s174, 3
          %s177 = smul.addr %s176, 8
          %s178 = scalar_lea.vmem %s1, %s177
          %s179 = smul.u32 2, %s13
        $region24: #{tpu_custom_call.1} parent=15 // pred_fallthru
          _
        // Predicated region
        $region25: #{tpu_custom_call.1} parent=15 // pred_check
          %p180 = pneg %p85
        $region26: #{tpu_custom_call.1} parent=15 // pred_check_branch
          %182 = sbr.rel (%p180) target = $region28
        $region27: #{tpu_custom_call.1} parent=15 // pred_region
          %s183 = smul.u32 2, %s13
          %p184 = scmp.lt.s32.totalorder %s183, 3
          %s185 = scalar_select %p184, %s183, 3
          %s186 = smul.addr %s185, 4
          %s187 = scalar_lea.vmem %s2, %s186
          %s188 = smul.u32 2, %s13
        $region28: #{tpu_custom_call.1} parent=15 // pred_fallthru
          _
        // Predicated region
        $region29: #{tpu_custom_call.1} parent=15 // pred_check
          %p189 = pneg %p111
        $region30: #{tpu_custom_call.1} parent=15 // pred_check_branch
          %191 = sbr.rel (%p189) target = $region32
        $region31: #{tpu_custom_call.1} parent=15 // pred_region
          %s192 = smul.u32 2, %s13
          %p193 = scmp.lt.s32.totalorder %s192, 3
          %s194 = scalar_select %p193, %s192, 3
          %s195 = smul.addr %s194, 2
          %s196 = smul.addr %s195, 4
          %s197 = scalar_lea.vmem %s3, %s196
          %s198 = smul.u32 2, %s13
        $region32: #{tpu_custom_call.1} parent=15 // pred_fallthru
          _
      $region16: #{tpu_custom_call.1} parent=5 // pred_fallthru
        _
      %p199 = scmp.le.s32.totalorder 1, %s13
      %p200 = scmp.lt.s32.totalorder %s13, 3
      %p201 = pnand %p199, %p200
      %p202 = pneg %p201
      // Predicated region
      $region33: #{tpu_custom_call.1} parent=5 // pred_check
        _
      $region34: #{tpu_custom_call.1} parent=5 // pred_check_branch
        %204 = sbr.rel (%p201) target = $region36
      $region35: #{tpu_custom_call.1} parent=5 // pred_region
        %s205 = ssub.s32 %s13, 1
        %s206 = smul.u32 2, %s18
        %p207 = scmp.lt.s32.totalorder %s206, 3
        %s208 = scalar_select %p207, %s206, 3
        %s209 = smul.addr %s208, 8
        %s210 = scalar_lea.vmem %s0, %s209
        %p211 = pneg %p39
        %p212 = pneg %p36
        %s213 = smul.u32 2, %s18
        %p214 = scmp.lt.s32.totalorder %s213, 3
        %s215 = scalar_select %p214, %s213, 3
        %s216 = smul.addr %s215, 8
        %s217 = scalar_lea.vmem %s1, %s216
        %p218 = pneg %p65
        %p219 = pneg %p62
        %s220 = smul.u32 2, %s18
        %p221 = scmp.lt.s32.totalorder %s220, 3
        %s222 = scalar_select %p221, %s220, 3
        %s223 = smul.addr %s222, 4
        %s224 = scalar_lea.vmem %s2, %s223
        %p225 = pneg %p91
        %p226 = pneg %p88
        %s227 = smul.u32 2, %s18
        %p228 = scmp.lt.s32.totalorder %s227, 3
        %s229 = scalar_select %p228, %s227, 3
        %s230 = smul.addr %s229, 2
        %s231 = smul.addr %s230, 4
        %s232 = scalar_lea.vmem %s3, %s231
        %p233 = pneg %p117
        %p234 = pneg %p114
        %p235 = pneg %p143
        %p236 = pneg %p140
        %s237 = sand.u32 %s130, 1
        %s238 = scalar_lea.sflag [#allocation3], %s237
        %s239 = sand.u32 %s130, 1
        %s240 = smul.addr %s239, 16
        %s241 = scalar_lea.vmem [#allocation2], %s240
        %s242 = smul.u32 2, %s18
        %p243 = scmp.lt.s32.totalorder %s242, 3
        %s244 = scalar_select %p243, %s242, 3
        %s245 = smul.addr %s244, 8
        %s246 = scalar_lea.vmem %s0, %s245
        %s247 = smul.u32 2, %s18
        %s248 = smul.u32 2, %s18
        %p249 = scmp.lt.s32.totalorder %s248, 3
        %s250 = scalar_select %p249, %s248, 3
        %s251 = smul.addr %s250, 8
        %s252 = scalar_lea.vmem %s1, %s251
        %s253 = smul.u32 2, %s18
        %s254 = smul.u32 2, %s18
        %p255 = scmp.lt.s32.totalorder %s254, 3
        %s256 = scalar_select %p255, %s254, 3
        %s257 = smul.addr %s256, 4
        %s258 = scalar_lea.vmem %s2, %s257
        %s259 = smul.u32 2, %s18
        %s260 = smul.u32 2, %s18
        %p261 = scmp.lt.s32.totalorder %s260, 3
        %s262 = scalar_select %p261, %s260, 3
        %s263 = smul.addr %s262, 2
        %s264 = smul.addr %s263, 4
        %s265 = scalar_lea.vmem %s3, %s264
        %s266 = smul.u32 2, %s18
        %s267 = smul.u32 2, %s18
        %v269 = vld [vmem:[%s246] sm:$0xff]
        %vm270 = vcmask 130048
        %v271 = vsel %vm270, %v269, -inf
        %272 = vmax.xlane.f32.xlu0 %v271
        %v273 = vpop.xlane.xlu0 %272
        %v274 = vsub.f32 %v269, %v273
        %v275 = vmul.f32 %v274, 1.442695
        %v276 = vpow.pop %v275
        %v277 = vsel %vm270, %v276, 0.0
        %278 = vadd.xlane.f32.xlu0 %v277
        %v279 = vpop.xlane.xlu0 %278
        %v280 = vrcp.pop %v279
        %v281 = vmul.f32 %v276, %v280
        %v282 = vpack.c.bf16 %v281, %v281
        %v283 = vld [vmem:[%s265] sm:$0xf]
        %v284 = vld [vmem:[%s265 + $0x4] sm:$0xf]
        %v285 = vld [vmem:[%s252] sm:$0xff]
        %v286 = vld [vmem:[%s258] sm:$0xf]
        %288 = vset.pattern.permute.xlu0 0
        %289 = vperm.xlu0 %288, %v285
        %v290 = vpop.permute.xlu0 %289
        %v292 = vlaneseq
        %v293 = vshrl.u32 %v292, 7
        %v294 = vsub.s32 0, %v293
        %v295 = vrot.slane %v286, %v294
        %v296 = vmin.f32 %v290, %v295
        %v297 = vmax.f32 %v290, %v295
        %298 = vset.pattern.permute.xlu0 1
        %299 = vperm.xlu0 %298, %v285
        %v300 = vpop.permute.xlu0 %299
        %v302 = vlaneseq
        %v303 = vshrl.u32 %v302, 7
        %v304 = vsub.s32 1, %v303
        %v305 = vrot.slane %v286, %v304
        %v306 = vmin.f32 %v300, %v305
        %v307 = vmax.f32 %v300, %v305
        %308 = vset.pattern.permute.xlu0 2
        %309 = vperm.xlu0 %308, %v285
        %v310 = vpop.permute.xlu0 %309
        %v312 = vlaneseq
        %v313 = vshrl.u32 %v312, 7
        %v314 = vsub.s32 2, %v313
        %v315 = vrot.slane %v286, %v314
        %v316 = vmin.f32 %v310, %v315
        %v317 = vmax.f32 %v310, %v315
        %318 = vset.pattern.permute.xlu0 3
        %319 = vperm.xlu0 %318, %v285
        %v320 = vpop.permute.xlu0 %319
        %v322 = vlaneseq
        %v323 = vshrl.u32 %v322, 7
        %v324 = vsub.s32 3, %v323
        %v325 = vrot.slane %v286, %v324
        %v326 = vmin.f32 %v320, %v325
        %v327 = vmax.f32 %v320, %v325
        %v328 = vsub.f32 %v297, %v296
        %v329 = vsub.f32 %v307, %v306
        %v330 = vadd.f32 %v328, %v329
        %v331 = vsub.f32 %v317, %v316
        %v332 = vadd.f32 %v330, %v331
        %v333 = vsub.f32 %v327, %v326
        %v334 = vadd.f32 %v332, %v333
        %v337 = vunpack.c.l.b16 %v283
        %v338 = vunpack.c.l.b16 %v284
        %v339 = vpack.c.b16 %v338, %v337
        %v342 = vsel %vm270, %v282, 0
        %344 = vmatprep.subr.bf16.mxu0 0
        %345 = vmatpush1.bf16.msra.mxu0 %v339
        %346 = vmatprep.subr.bf16.mxu0 0
        %347 = vmatpush1.bf16.msra.mxu0 0
        %348 = vmatprep.subr.bf16.mxu0 0
        %349 = vmatpush1.bf16.msra.mxu0 0
        %350 = vmatprep.subr.bf16.mxu0 0
        %351 = vmatpush1.bf16.msra.mxu0 0
        %352 = vmatprep.subr.bf16.mxu0 0
        %353 = vmatpush1.bf16.msra.mxu0 0
        %354 = vmatprep.subr.bf16.mxu0 0
        %355 = vmatpush1.bf16.msra.mxu0 0
        %356 = vmatprep.subr.bf16.mxu0 0
        %357 = vmatpush1.bf16.msra.mxu0 0
        %358 = vmatprep.subr.bf16.mxu0 0
        %359 = vmatpush1.bf16.msra.mxu0 0
        %360 = vmatprep.subr.bf16.mxu0 0
        %361 = vmatpush1.bf16.msra.mxu0 0
        %362 = vmatprep.subr.bf16.mxu0 0
        %363 = vmatpush1.bf16.msra.mxu0 0
        %364 = vmatprep.subr.bf16.mxu0 0
        %365 = vmatpush1.bf16.msra.mxu0 0
        %366 = vmatprep.subr.bf16.mxu0 0
        %367 = vmatpush1.bf16.msra.mxu0 0
        %368 = vmatprep.subr.bf16.mxu0 0
        %369 = vmatpush1.bf16.msra.mxu0 0
        %370 = vmatprep.subr.bf16.mxu0 0
        %371 = vmatpush1.bf16.msra.mxu0 0
        %372 = vmatprep.subr.bf16.mxu0 0
        %373 = vmatpush1.bf16.msra.mxu0 0
        %374 = vmatprep.subr.bf16.mxu0 0
        %375 = vmatpush1.bf16.msra.mxu0 0
        %376 = vmatprep.mubr.bf16.mxu0 0
        %377 = vmatmul.mubr.bf16.gmra.mrb[0].mxu0 %v342
        %v378 = vpop.f32.mrb[0].mxu0
        %v379 = vadd.f32 %v334, %v378
        %v380 = vpop.f32.mrb[0].mxu0
        %v381 = vpop.f32.mrb[0].mxu0
        %v382 = vpop.f32.mrb[0].mxu0
        %383 = vdwg.mxu0
        %v384 = vsub.f32 %v316, %v297
        %v385 = vmax.f32 %v384, 0.0
        %v386 = vsub.f32 %v326, %v307
        %v387 = vmax.f32 %v386, 0.0
        %v388 = vmul.f32 %v385, %v387
        %389 = vrot.lane.b32.xlu0 %v285, 2
        %v390 = vpop.permute.xlu0 %389
        %v392 = vsub.f32 %v285, %v390
        %394 = vrot.lane.b32.xlu0 %v392, 127
        %v395 = vpop.permute.xlu0 %394
        %v397 = vmul.f32 %v392, %v395
        %v399 = vrot.slane %v286, 6
        %v401 = vsub.f32 %v286, %v399
        %v403 = vrot.slane %v401, 1
        %v405 = vmul.f32 %v401, %v403
        %407 = vset.pattern.permute.xlu0 2
        %408 = vperm.xlu0 %407, %v397
        %v409 = vpop.permute.xlu0 %408
        %v411 = vlaneseq
        %v412 = vshrl.u32 %v411, 7
        %v413 = vsub.s32 2, %v412
        %v414 = vrot.slane %v405, %v413
        %v415 = vadd.f32 %v409, %v414
        %v416 = vsub.f32 %v415, %v388
        %v417 = vsub.f32 %v317, %v296
        %v418 = vsub.f32 %v327, %v306
        %v419 = vmul.f32 %v417, %v418
        %v420 = vrcp.pop %v416
        %v421 = vmul.f32 %v388, %v420
        %v422 = vsub.f32 %v416, %v419
        %v423 = vrcp.pop %v419
        %v424 = vmul.f32 %v422, %v423
        %v425 = vadd.f32 %v421, %v424
        %v426 = vsub.f32 %v379, %v425
        %427 = vst [vmem:[%s241] sm:$0xff] %v426
        %v428 = vld [vmem:[%s246 + $0x8] sm:$0xff]
        %v429 = vsel %vm270, %v428, -inf
        %430 = vmax.xlane.f32.xlu0 %v429
        %v431 = vpop.xlane.xlu0 %430
        %v432 = vsub.f32 %v428, %v431
        %v433 = vmul.f32 %v432, 1.442695
        %v434 = vpow.pop %v433
        %v435 = vsel %vm270, %v434, 0.0
        %436 = vadd.xlane.f32.xlu0 %v435
        %v437 = vpop.xlane.xlu0 %436
        %v438 = vrcp.pop %v437
        %v439 = vmul.f32 %v434, %v438
        %v440 = vpack.c.bf16 %v439, %v439
        %s441 = scalar_lea.vmem %s265, 8
        %v442 = vld [vmem:[%s441] sm:$0xf]
        %v443 = vld [vmem:[%s441 + $0x4] sm:$0xf]
        %v444 = vld [vmem:[%s252 + $0x8] sm:$0xff]
        %s445 = scalar_lea.vmem %s258, 4
        %v446 = vld [vmem:[%s445] sm:$0xf]
        %448 = vset.pattern.permute.xlu0 0
        %449 = vperm.xlu0 %448, %v444
        %v450 = vpop.permute.xlu0 %449
        %v452 = vlaneseq
        %v453 = vshrl.u32 %v452, 7
        %v454 = vsub.s32 0, %v453
        %v455 = vrot.slane %v446, %v454
        %v456 = vmin.f32 %v450, %v455
        %v457 = vmax.f32 %v450, %v455
        %458 = vset.pattern.permute.xlu0 1
        %459 = vperm.xlu0 %458, %v444
        %v460 = vpop.permute.xlu0 %459
        %v462 = vlaneseq
        %v463 = vshrl.u32 %v462, 7
        %v464 = vsub.s32 1, %v463
        %v465 = vrot.slane %v446, %v464
        %v466 = vmin.f32 %v460, %v465
        %v467 = vmax.f32 %v460, %v465
        %468 = vset.pattern.permute.xlu0 2
        %469 = vperm.xlu0 %468, %v444
        %v470 = vpop.permute.xlu0 %469
        %v472 = vlaneseq
        %v473 = vshrl.u32 %v472, 7
        %v474 = vsub.s32 2, %v473
        %v475 = vrot.slane %v446, %v474
        %v476 = vmin.f32 %v470, %v475
        %v477 = vmax.f32 %v470, %v475
        %478 = vset.pattern.permute.xlu0 3
        %479 = vperm.xlu0 %478, %v444
        %v480 = vpop.permute.xlu0 %479
        %v482 = vlaneseq
        %v483 = vshrl.u32 %v482, 7
        %v484 = vsub.s32 3, %v483
        %v485 = vrot.slane %v446, %v484
        %v486 = vmin.f32 %v480, %v485
        %v487 = vmax.f32 %v480, %v485
        %v488 = vsub.f32 %v457, %v456
        %v489 = vsub.f32 %v467, %v466
        %v490 = vadd.f32 %v488, %v489
        %v491 = vsub.f32 %v477, %v476
        %v492 = vadd.f32 %v490, %v491
        %v493 = vsub.f32 %v487, %v486
        %v494 = vadd.f32 %v492, %v493
        %v497 = vunpack.c.l.b16 %v442
        %v498 = vunpack.c.l.b16 %v443
        %v499 = vpack.c.b16 %v498, %v497
        %v502 = vsel %vm270, %v440, 0
        %504 = vmatprep.subr.bf16.mxu0 0
        %505 = vmatpush1.bf16.msra.mxu0 %v499
        %506 = vmatprep.subr.bf16.mxu0 0
        %507 = vmatpush1.bf16.msra.mxu0 0
        %508 = vmatprep.subr.bf16.mxu0 0
        %509 = vmatpush1.bf16.msra.mxu0 0
        %510 = vmatprep.subr.bf16.mxu0 0
        %511 = vmatpush1.bf16.msra.mxu0 0
        %512 = vmatprep.subr.bf16.mxu0 0
        %513 = vmatpush1.bf16.msra.mxu0 0
        %514 = vmatprep.subr.bf16.mxu0 0
        %515 = vmatpush1.bf16.msra.mxu0 0
        %516 = vmatprep.subr.bf16.mxu0 0
        %517 = vmatpush1.bf16.msra.mxu0 0
        %518 = vmatprep.subr.bf16.mxu0 0
        %519 = vmatpush1.bf16.msra.mxu0 0
        %520 = vmatprep.subr.bf16.mxu0 0
        %521 = vmatpush1.bf16.msra.mxu0 0
        %522 = vmatprep.subr.bf16.mxu0 0
        %523 = vmatpush1.bf16.msra.mxu0 0
        %524 = vmatprep.subr.bf16.mxu0 0
        %525 = vmatpush1.bf16.msra.mxu0 0
        %526 = vmatprep.subr.bf16.mxu0 0
        %527 = vmatpush1.bf16.msra.mxu0 0
        %528 = vmatprep.subr.bf16.mxu0 0
        %529 = vmatpush1.bf16.msra.mxu0 0
        %530 = vmatprep.subr.bf16.mxu0 0
        %531 = vmatpush1.bf16.msra.mxu0 0
        %532 = vmatprep.subr.bf16.mxu0 0
        %533 = vmatpush1.bf16.msra.mxu0 0
        %534 = vmatprep.subr.bf16.mxu0 0
        %535 = vmatpush1.bf16.msra.mxu0 0
        %536 = vmatprep.mubr.bf16.mxu0 0
        %537 = vmatmul.mubr.bf16.gmra.mrb[0].mxu0 %v502
        %v538 = vpop.f32.mrb[0].mxu0
        %v539 = vadd.f32 %v494, %v538
        %v540 = vpop.f32.mrb[0].mxu0
        %v541 = vpop.f32.mrb[0].mxu0
        %v542 = vpop.f32.mrb[0].mxu0
        %543 = vdwg.mxu0
        %v544 = vsub.f32 %v476, %v457
        %v545 = vmax.f32 %v544, 0.0
        %v546 = vsub.f32 %v486, %v467
        %v547 = vmax.f32 %v546, 0.0
        %v548 = vmul.f32 %v545, %v547
        %549 = vrot.lane.b32.xlu0 %v444, 2
        %v550 = vpop.permute.xlu0 %549
        %v552 = vsub.f32 %v444, %v550
        %554 = vrot.lane.b32.xlu0 %v552, 127
        %v555 = vpop.permute.xlu0 %554
        %v557 = vmul.f32 %v552, %v555
        %v559 = vrot.slane %v446, 6
        %v561 = vsub.f32 %v446, %v559
        %v563 = vrot.slane %v561, 1
        %v565 = vmul.f32 %v561, %v563
        %567 = vset.pattern.permute.xlu0 2
        %568 = vperm.xlu0 %567, %v557
        %v569 = vpop.permute.xlu0 %568
        %v571 = vlaneseq
        %v572 = vshrl.u32 %v571, 7
        %v573 = vsub.s32 2, %v572
        %v574 = vrot.slane %v565, %v573
        %v575 = vadd.f32 %v569, %v574
        %v576 = vsub.f32 %v575, %v548
        %v577 = vsub.f32 %v477, %v456
        %v578 = vsub.f32 %v487, %v466
        %v579 = vmul.f32 %v577, %v578
        %v580 = vrcp.pop %v576
        %v581 = vmul.f32 %v548, %v580
        %v582 = vsub.f32 %v576, %v579
        %v583 = vrcp.pop %v579
        %v584 = vmul.f32 %v582, %v583
        %v585 = vadd.f32 %v581, %v584
        %v586 = vsub.f32 %v539, %v585
        %587 = vst [vmem:[%s241 + $0x8] sm:$0xff] %v586
        %s588 = sand.u32 %s130, 1
        %s589 = scalar_lea.sflag [#allocation3], %s588
        %s590 = sand.u32 %s130, 1
        %s591 = smul.addr %s590, 16
        %s592 = scalar_lea.vmem [#allocation2], %s591
        // Predicated region
        $region37: #{tpu_custom_call.1} parent=35 // pred_check
          %p593 = pneg %p140
        $region38: #{tpu_custom_call.1} parent=35 // pred_check_branch
          %595 = sbr.rel (%p593) target = $region40
        $region39: #{tpu_custom_call.1} parent=35 // pred_region
          %s596 = smul.u32 2, %s18
          %s598 = ssub.s32 256, 256
          %599 = vsyncadd %s589, %s598
          %s600 = smul.addr %s596, 128
          %s601 = scalar_lea.hbm %s4, %s600
          %s602 = sshll.u32 %s592, 4
          %s603 = int_to_ptr.vmem [resolvable:$true] %s602
          %608 = dma.vmem_to_hbm [thread:$0]  %s603, 256, %s601, %s589, 128, 128, 8
        $region40: #{tpu_custom_call.1} parent=35 // pred_fallthru
          _
      $region36: #{tpu_custom_call.1} parent=5 // pred_fallthru
        _
      %p609 = scmp.le.s32.totalorder 2, %s13
      // Predicated region
      $region41: #{tpu_custom_call.1} parent=5 // pred_check
        %p610 = pneg %p609
      $region42: #{tpu_custom_call.1} parent=5 // pred_check_branch
        %612 = sbr.rel (%p610) target = $region44
      $region43: #{tpu_custom_call.1} parent=5 // pred_region
        %s613 = ssub.s32 %s13, 2
        // Predicated region
        $region45: #{tpu_custom_call.1} parent=43 // pred_check
          %p614 = pneg %p146
        $region46: #{tpu_custom_call.1} parent=43 // pred_check_branch
          %616 = sbr.rel (%p614) target = $region48
        $region47: #{tpu_custom_call.1} parent=43 // pred_region
          %s617 = sand.u32 %s131, 1
          %s618 = scalar_lea.sflag [#allocation3], %s617
          %s619 = sand.u32 %s131, 1
          %s620 = smul.addr %s619, 16
          %s621 = scalar_lea.vmem [#allocation2], %s620
          %622 = dma.done %s618, 256
        $region48: #{tpu_custom_call.1} parent=43 // pred_fallthru
          _
      $region44: #{tpu_custom_call.1} parent=5 // pred_fallthru
        _
    $region6: #{tpu_custom_call.1} parent=1 // loop_footer
      %s17 = sadd.s32 1, %s13
    $region7: #{tpu_custom_call.1} parent=1 // loop_footer_branch
      %12 = sbr.rel target = $region3
    $region8: #{tpu_custom_call.1} parent=1 // loop_exit
      _
    %623 = vsyncpa [#allocation3], 1
    %s624 = scalar_lea.sflag [#allocation3], 1
    %625 = vsyncpa %s624, 1

</llo_original>
